<compile_context>
chip_gen: v5e
topology: v5e:2x2
jax: 0.10.0
libtpu: 0.0.40
codegen_flags: <defaults>
</compile_context>

<pallas_src>
import functools

import jax
import jax.numpy as jnp
from jax.experimental import pallas as pl
from jax.experimental.pallas import tpu as pltpu


_NEG_BIG = -1e30   # finite "-inf" mask value; Python float -> jaxpr literal (no captured const)


# ---------------------------------------------------------------------------
# Generation detection & tiling plan
# ---------------------------------------------------------------------------

def _tpu_generation():
    try:
        kind = jax.devices()[0].device_kind.lower()
    except Exception:
        return None
    if "7x" in kind or "v7" in kind:
        return 7
    if "v6" in kind:
        return 6
    if "v5" in kind:
        return 5
    return None


def _plan(n, gen):
    """Returns (tile_q, tile_k, n_pad, vmem_cap_bytes, compute_dtype)."""
    if gen == 7:          # 64 MiB physical VMEM per TC -> smaller tiles, tight cap
        max_tq, max_tk, cap, cdtype = 256, 512, 56 << 20, jnp.bfloat16
    elif gen == 6:        # 128 MiB VMEM, bf16 VPU/EUP
        max_tq, max_tk, cap, cdtype = 512, 512, 100 << 20, jnp.bfloat16
    elif gen == 5:        # 128 MiB VMEM, no bf16 VPU/EUP -> keep f32 elementwise
        max_tq, max_tk, cap, cdtype = 512, 512, 100 << 20, jnp.float32
    else:                 # unknown chip / interpreter: conservative
        max_tq, max_tk, cap, cdtype = 256, 512, 48 << 20, jnp.float32

    if n <= min(max_tq, max_tk):
        # Single block per axis (block == full array dim is always legal).
        return n, n, n, cap, cdtype

    # Pad n to a multiple of 128 and use power-of-two-times-128 tiles that
    # divide it (minimal padding, bounded tiles -> no giant fallback tile).
    n_pad = ((n + 127) // 128) * 128

    def pick(max_tile):
        t = 128
        while t * 2 <= max_tile and n_pad % (t * 2) == 0:
            t *= 2
        return t

    return pick(max_tq), pick(max_tk), n_pad, cap, cdtype


def _vmem_limit_bytes(tq, tk, gf, n_heads, n_hidden, cap, compute_dtype):
    cbytes = 2 if compute_dtype == jnp.bfloat16 else 4
    est = (
        2 * tq * tk                                   # int8 adj chunk, double buffered
        + 2 * tk * gf * 2                             # bf16 g chunk, double buffered
        + 2 * (tq + tk) * n_heads * cbytes            # sl tile / sr chunk
        + 2 * tq * gf * 4                             # f32 output tile
        + n_heads * tq * (2 * 128 + max(n_hidden, 128)) * 4   # m/l/acc scratch (lane padded)
        + 6 * tq * tk * 4                             # live e/p temporaries + headroom
        + (16 << 20)                                  # Mosaic internal scratch headroom
    )
    return int(min(max(est, 32 << 20), cap))


# ---------------------------------------------------------------------------
# Kernel 1: projection  g = h @ W  + fused per-head attention scores
# ---------------------------------------------------------------------------

def _project_kernel(h_ref, w_ref, a_ref, g_ref, s_ref):
    # bf16 MXU operands, f32 accumulation.
    g32 = jnp.dot(h_ref[...], w_ref[...], preferred_element_type=jnp.float32)
    g_bf = g32.astype(jnp.bfloat16)
    g_ref[...] = g_bf
    # One (tile, gf) @ (gf, 2*heads) bf16 matmul instead of 2*heads lane-sparse
    # (tile, F) @ (F, 1) matmuls; both operands bf16 -> no f32 MXU emulation.
    s_ref[...] = jnp.dot(g_bf, a_ref[...], preferred_element_type=jnp.float32)


# ---------------------------------------------------------------------------
# Kernel 2: masked online-softmax attention + aggregation
#   grid = (query row tiles ["parallel"], neighbor chunks ["arbitrary"])
# ---------------------------------------------------------------------------

def _attn_kernel(sl_ref, srt_ref, adj_ref, g_ref, o_ref, m_sc, l_sc, acc_sc, *,
                 n_heads, n_hidden, negative_slope):
    j = pl.program_id(1)

    @pl.when(j == 0)
    def _init():
        m_sc[...] = jnp.full(m_sc.shape, _NEG_BIG, dtype=jnp.float32)
        l_sc[...] = jnp.zeros(l_sc.shape, dtype=jnp.float32)
        acc_sc[...] = jnp.zeros(acc_sc.shape, dtype=jnp.float32)

    # Hoisted once per (row tile, neighbor chunk), not per head.
    mask = adj_ref[...] == 0                                    # (TQ, TK) bool

    for hd in range(n_heads):                                   # small static unroll
        sl = sl_ref[:, hd:hd + 1]                               # (TQ, 1)  compute dtype
        sr = srt_ref[hd:hd + 1, :]                              # (1, TK)  compute dtype
        e = sl + sr                                             # (TQ, TK)
        e = jnp.where(e >= 0, e, negative_slope * e)            # LeakyReLU (VPU)
        e = jnp.where(mask, _NEG_BIG, e)                        # finite masked fill
        # NOTE: rows with no edges end up with a uniform softmax instead of the
        # reference's NaN; self-loops (as in the demo) make them identical.

        # Online softmax: running max / denom in f32, exp in the compute dtype
        # (bf16 on v6e/v7x -> EUP/VPU at ~2x throughput, p born bf16 for the MXU).
        chunk_max = jnp.max(e, axis=1, keepdims=True).astype(jnp.float32)
        m_old = m_sc[hd]                                        # (TQ, 1) f32
        m_new = jnp.maximum(m_old, chunk_max)
        alpha = jnp.exp(m_old - m_new)                          # rescale of old stats
        p = jnp.exp(e - m_new.astype(e.dtype))                  # (TQ, TK)
        psum = jnp.sum(p.astype(jnp.float32), axis=1, keepdims=True)

        gh = g_ref[:, hd * n_hidden:(hd + 1) * n_hidden]        # (TK, F) bf16 Ref slice
        pv = jnp.dot(p.astype(jnp.bfloat16), gh,
                     preferred_element_type=jnp.float32)        # (TQ, F) MXU, f32 acc

        # Accumulate straight into VMEM scratch (no head_out list / concatenate
        # per chunk -> only one head's (TQ,TK) temporaries live at a time).
        l_sc[hd] = alpha * l_sc[hd] + psum
        acc_sc[hd] = alpha * acc_sc[hd] + pv
        m_sc[hd] = m_new

    @pl.when(j == pl.num_programs(1) - 1)
    def _finalize():
        # TODO(synk): dropout on the attention probabilities is identity (eval mode).
        outs = []
        for hd in range(n_heads):
            inv = pl.reciprocal(l_sc[hd], approx=True)          # EUP vrcp, off the VPU
            outs.append(acc_sc[hd] * inv)
        # Single lane-dense store of the whole (TQ, heads*F) output tile.
        o_ref[...] = jnp.concatenate(outs, axis=1).astype(o_ref.dtype)


# ---------------------------------------------------------------------------
# Wrapper
# ---------------------------------------------------------------------------

def gat_forward(h, adj_mat, w_lin, attn_w, *, n_heads, n_hidden,
                negative_slope=0.2, is_concat=True):
    """Pallas GAT layer forward (eval mode).

    h        : (n_nodes, in_features)
    adj_mat  : (n_nodes, n_nodes, 1) or (n_nodes, n_nodes)
    w_lin    : (in_features, n_heads * n_hidden)   (= torch linear.weight.T)
    attn_w   : (2 * n_hidden, 1)                   (= torch attn.weight.T)
    """
    n = h.shape[0]
    d_in = h.shape[1]
    gf = n_heads * n_hidden

    gen = _tpu_generation()
    tq, tk, n_pad, cap, compute_dtype = _plan(n, gen)

    adj_i8 = (adj_mat.reshape(n, n) != 0).astype(jnp.int8)      # compact mask
    h_bf = h.astype(jnp.bfloat16)
    if n_pad != n:
        pad = n_pad - n
        h_bf = jnp.pad(h_bf, ((0, pad), (0, 0)))                # zero rows
        adj_i8 = jnp.pad(adj_i8, ((0, pad), (0, pad)))          # padded neighbors masked

    # Block-diagonal fused-score matrix A (bf16): col h -> a_l of head h, col H+h -> a_r.
    a_l = attn_w[:n_hidden, 0].astype(jnp.float32)
    a_r = attn_w[n_hidden:, 0].astype(jnp.float32)
    eye = jnp.eye(n_heads, dtype=jnp.float32)
    A = jnp.concatenate(
        [jnp.kron(eye, a_l.reshape(n_hidden, 1)),
         jnp.kron(eye, a_r.reshape(n_hidden, 1))], axis=1).astype(jnp.bfloat16)

    w_bf = w_lin.astype(jnp.bfloat16)

    # ---- Kernel 1: projection + fused per-head attention scores -----------
    g_bf, scores = pl.pallas_call(
        _project_kernel,
        grid=(n_pad // tq,),
        in_specs=[
            pl.BlockSpec((tq, d_in), lambda i: (i, 0)),             # h row tile
            pl.BlockSpec((d_in, gf), lambda i: (0, 0)),             # W resident
            pl.BlockSpec((gf, 2 * n_heads), lambda i: (0, 0)),      # A resident
        ],
        out_specs=(
            pl.BlockSpec((tq, gf), lambda i: (i, 0)),
            pl.BlockSpec((tq, 2 * n_heads), lambda i: (i, 0)),
        ),
        out_shape=(
            jax.ShapeDtypeStruct((n_pad, gf), jnp.bfloat16),
            jax.ShapeDtypeStruct((n_pad, 2 * n_heads), jnp.float32),
        ),
        compiler_params=pltpu.CompilerParams(
            dimension_semantics=("parallel",)),
    )(h_bf, w_bf, A)

    sl = scores[:, :n_heads].astype(compute_dtype)        # (n_pad, heads)  "query" term
    sr_t = scores[:, n_heads:].T.astype(compute_dtype)    # (heads, n_pad)  "neighbor" term

    # ---- Kernel 2: neighbor-chunked online-softmax attention --------------
    kernel = functools.partial(_attn_kernel, n_heads=n_heads, n_hidden=n_hidden,
                               negative_slope=float(negative_slope))
    out = pl.pallas_call(
        kernel,
        grid=(n_pad // tq, n_pad // tk),
        in_specs=[
            pl.BlockSpec((tq, n_heads), lambda i, j: (i, 0)),       # sl row tile
            pl.BlockSpec((n_heads, tk), lambda i, j: (0, j)),       # sr_t neighbor chunk
            pl.BlockSpec((tq, tk), lambda i, j: (i, j)),            # adj chunk (int8)
            pl.BlockSpec((tk, gf), lambda i, j: (j, 0)),            # g neighbor chunk (bf16)
        ],
        out_specs=pl.BlockSpec((tq, gf), lambda i, j: (i, 0)),
        out_shape=jax.ShapeDtypeStruct((n_pad, gf), jnp.float32),
        scratch_shapes=[
            pltpu.VMEM((n_heads, tq, 1), jnp.float32),              # running max
            pltpu.VMEM((n_heads, tq, 1), jnp.float32),              # running denom
            pltpu.VMEM((n_heads, tq, n_hidden), jnp.float32),       # running weighted sum
        ],
        compiler_params=pltpu.CompilerParams(
            dimension_semantics=("parallel", "arbitrary"),          # megacore over row tiles
            vmem_limit_bytes=_vmem_limit_bytes(tq, tk, gf, n_heads, n_hidden,
                                               cap, compute_dtype)),
    )(sl, sr_t, adj_i8, g_bf)

    out = out[:n]
    if is_concat:
        return out                                                  # (n, heads*F)
    return out.reshape(n, n_heads, n_hidden).mean(axis=1)


# ---------------------------------------------------------------------------
# Pure-JAX f32 reference (mirrors the PyTorch forward, dropout in eval mode)
# ---------------------------------------------------------------------------

def _reference(h, adj_mat, w_lin, attn_w, *, n_heads, n_hidden,
               negative_slope=0.2, is_concat=True):
    n = h.shape[0]
    g = (h @ w_lin).reshape(n, n_heads, n_hidden)
    a_l = attn_w[:n_hidden, 0]
    a_r = attn_w[n_hidden:, 0]
    sl = jnp.einsum('nhf,f->nh', g, a_l)
    sr = jnp.einsum('nhf,f->nh', g, a_r)
    e = sl[:, None, :] + sr[None, :, :]                   # (n, n, heads)
    e = jnp.where(e >= 0, e, negative_slope * e)
    e = jnp.where(adj_mat.reshape(n, n, 1) == 0, -jnp.inf, e)
    a = jax.nn.softmax(e, axis=1)
    res = jnp.einsum('ijh,jhf->ihf', a, g)
    if is_concat:
        return res.reshape(n, n_heads * n_hidden)
    return res.mean(axis=1)


if __name__ == "__main__":
    # Small but tiling-exercising shapes.
    n_nodes = 512
    in_features = 64
    out_features = 64
    n_heads = 4
    n_hidden = out_features // n_heads          # is_concat=True -> 16
    negative_slope = 0.2

    key = jax.random.PRNGKey(0)
    k1, k2, k3, k4 = jax.random.split(key, 4)

    h = jax.random.normal(k1, (n_nodes, in_features), jnp.float32)

    # Deterministic synthetic parameters (shapes match nn.Linear in __init__).
    w_lin = jax.random.normal(k2, (in_features, n_heads * n_hidden),
                              jnp.float32) * (1.0 / jnp.sqrt(in_features))
    attn_w = jax.random.normal(k3, (2 * n_hidden, 1), jnp.float32) * 0.1

    # Random adjacency with self-loops, shape (n, n, 1) per PyTorch usage.
    adj = (jax.random.uniform(k4, (n_nodes, n_nodes)) < 0.1).astype(jnp.float32)
    adj = jnp.maximum(adj, jnp.eye(n_nodes, dtype=jnp.float32))
    adj_mat = adj[:, :, None]

    out = gat_forward(h, adj_mat, w_lin, attn_w,
                      n_heads=n_heads, n_hidden=n_hidden,
                      negative_slope=negative_slope, is_concat=True)
    out = jax.block_until_ready(out)

    ref = _reference(h, adj_mat, w_lin, attn_w,
                     n_heads=n_heads, n_hidden=n_hidden,
                     negative_slope=negative_slope, is_concat=True)

    assert out.shape == (n_nodes, n_heads * n_hidden)
    assert bool(jnp.isfinite(out).all()), "non-finite output"
    # bf16 MXU inputs + (on v6e/v7x) bf16 elementwise softmax + approx
    # reciprocal -> loosened tolerance vs the f32 reference.
    assert jnp.allclose(out, ref, atol=7.5e-2, rtol=7.5e-2), "mismatch vs reference"
    print("KERNEL_OK")
</pallas_src>

<mosaic_0001>
module attributes {stable_mosaic.version = 11 : i64} {
  func.func @_project_kernel(%arg0: i32, %arg1: memref<256x64xbf16, #tpu.memory_space<vmem>>, %arg2: memref<64x64xbf16, #tpu.memory_space<vmem>>, %arg3: memref<64x8xbf16, #tpu.memory_space<vmem>>, %arg4: memref<256x64xbf16, #tpu.memory_space<vmem>>, %arg5: memref<256x8xf32, #tpu.memory_space<vmem>>) attributes {dimension_semantics = [#tpu.dimension_semantics<parallel>], iteration_bounds = array<i64: 2>, scalar_prefetch = 0 : i64, scratch_operands = 0 : i64, tpu.core_type = #tpu.core_type<tc>, window_params = [{transform_indices = @transform_0, window_bounds = array<i64: 256, 64>}, {pipeline_mode = #tpu.pipeline_mode<synchronous>, transform_indices = @transform_1, window_bounds = array<i64: 64, 64>}, {pipeline_mode = #tpu.pipeline_mode<synchronous>, transform_indices = @transform_2, window_bounds = array<i64: 64, 8>}, {transform_indices = @transform_3, window_bounds = array<i64: 256, 64>}, {transform_indices = @transform_4, window_bounds = array<i64: 256, 8>}]} {
    %c0 = arith.constant 0 : index
    %c0_0 = arith.constant 0 : index
    %0 = vector.load %arg1[%c0, %c0_0] : memref<256x64xbf16, #tpu.memory_space<vmem>>, vector<256x64xbf16>
    %c0_1 = arith.constant 0 : index
    %c0_2 = arith.constant 0 : index
    %1 = vector.load %arg2[%c0_1, %c0_2] : memref<64x64xbf16, #tpu.memory_space<vmem>>, vector<64x64xbf16>
    %cst = arith.constant dense<0.000000e+00> : vector<256x64xf32>
    %2 = tpu.matmul %0, %1, %cst {dimension_numbers = #tpu.dot_dimension_numbers<[1], [0], [0], [1], [0, 0, 1, 1], [], []>} : vector<256x64xbf16>, vector<64x64xbf16>, vector<256x64xf32> -> vector<256x64xf32>
    %3 = arith.truncf %2 : vector<256x64xf32> to vector<256x64xbf16>
    %c0_3 = arith.constant 0 : index
    %c0_4 = arith.constant 0 : index
    %4 = vector.load %arg4[%c0_3, %c0_4] : memref<256x64xbf16, #tpu.memory_space<vmem>>, vector<256x64xbf16>
    tpu.vector_store %arg4[%c0_3, %c0_4], %3 {strides = array<i32>} : memref<256x64xbf16, #tpu.memory_space<vmem>>, vector<256x64xbf16>,
    %c0_5 = arith.constant 0 : index
    %c0_6 = arith.constant 0 : index
    %5 = vector.load %arg3[%c0_5, %c0_6] : memref<64x8xbf16, #tpu.memory_space<vmem>>, vector<64x8xbf16>
    %cst_7 = arith.constant dense<0.000000e+00> : vector<256x8xf32>
    %6 = tpu.matmul %3, %5, %cst_7 {dimension_numbers = #tpu.dot_dimension_numbers<[1], [0], [0], [1], [0, 0, 1, 1], [], []>} : vector<256x64xbf16>, vector<64x8xbf16>, vector<256x8xf32> -> vector<256x8xf32>
    %c0_8 = arith.constant 0 : index
    %c0_9 = arith.constant 0 : index
    %7 = vector.load %arg5[%c0_8, %c0_9] : memref<256x8xf32, #tpu.memory_space<vmem>>, vector<256x8xf32>
    tpu.vector_store %arg5[%c0_8, %c0_9], %6 {strides = array<i32>} : memref<256x8xf32, #tpu.memory_space<vmem>>, vector<256x8xf32>,
    return
  }
  func.func @transform_0(%arg0: i32) -> (i32, i32) {
    %c0_i32 = arith.constant 0 : i32
    %c0_i32_0 = arith.constant 0 : i32
    return %arg0, %c0_i32 : i32, i32
  }
  func.func @transform_1(%arg0: i32) -> (i32, i32) {
    %c0_i32 = arith.constant 0 : i32
    %c0_i32_0 = arith.constant 0 : i32
    %c0_i32_1 = arith.constant 0 : i32
    return %c0_i32, %c0_i32_0 : i32, i32
  }
  func.func @transform_2(%arg0: i32) -> (i32, i32) {
    %c0_i32 = arith.constant 0 : i32
    %c0_i32_0 = arith.constant 0 : i32
    %c0_i32_1 = arith.constant 0 : i32
    return %c0_i32, %c0_i32_0 : i32, i32
  }
  func.func @transform_3(%arg0: i32) -> (i32, i32) {
    %c0_i32 = arith.constant 0 : i32
    %c0_i32_0 = arith.constant 0 : i32
    return %arg0, %c0_i32 : i32, i32
  }
  func.func @transform_4(%arg0: i32) -> (i32, i32) {
    %c0_i32 = arith.constant 0 : i32
    %c0_i32_0 = arith.constant 0 : i32
    return %arg0, %c0_i32 : i32, i32
  }
}

</mosaic_0001>

<llo_original>
// kernel: tpu_custom_call.1
$region0: #{tpu_custom_call.1}
  #allocation0 [shape = 'u32[]', space=smem, size = 0x4, offset = 0x4, fixed_abs, tag = 'smem constant byte address 0x4 - core index']
  #allocation1 [shape = 'u32[72,128]{1,0:T(1,128)}', space=vmem, size = 0x9000, scoped, tag = 'internal scratch']
  %s0 = inlined_call_operand.vmem [shape: bf16[512,64], index: 0, kind: input, shape index: {}]
  %s1 = inlined_call_operand.vmem [shape: bf16[64,64], index: 1, kind: input, shape index: {}]
  %s2 = inlined_call_operand.vmem [shape: bf16[64,8], index: 2, kind: input, shape index: {}]
  %s3 = inlined_call_operand.vmem [shape: bf16[512,64], index: 3, kind: output, shape index: {0}]
  %s4 = inlined_call_operand.vmem [shape: f32[512,8], index: 4, kind: output, shape index: {1}]
  %5 = xla_tuple %s3, %s4
  %s6 = sld [smem:[#allocation0]]
  $region53: #{tpu_custom_call.1} parent=0
    _
  %s8 = ssub.s32 1, %s6
  %s9 = scalar_select 0, %s8, %s6
  loop: start=0, step=1, limit=4
  $region2: #{tpu_custom_call.1} parent=0 // loop_pre_header
    _
  $region3: #{tpu_custom_call.1} parent=0 // loop_header
    %s11 = sphi 0, %s15
    %p12 = scmp.ge.s32.totalorder %s11, 4
    %s21 = sphi 0, %s23
    %s24 = sphi 0, %s21
    %s25 = sphi 0, %s24
    %s41 = sphi 0, %s25
    %s45 = sphi 0, %s45
    %s47 = sphi 0, %s45
    %s48 = sphi 0, %s47
    %s62 = sphi 0, %s48
    %s66 = sphi 0, %s66
    %s68 = sphi 0, %s66
    %s69 = sphi 0, %s68
    %s83 = sphi 0, %s69
    %s89 = sphi 0, %s91
    %s92 = sphi 0, %s89
    %s93 = sphi 0, %s92
    %s109 = sphi 0, %s93
    %s115 = sphi 0, %s117
    %s118 = sphi 0, %s115
    %s119 = sphi 0, %s118
    %s135 = sphi 0, %s119
  $region4: #{tpu_custom_call.1} parent=0 // loop_header_branch
    %14 = sbr.rel (%p12) target = $region8
  $region5: #{tpu_custom_call.1} parent=0 // loop_body
    %s16 = ssub.s32 %s11, 1
    %s17 = ssub.s32 %s11, 2
    %s18 = sadd.s32 %s11, 1
    %s19 = ssub.s32 %s11, %s18
    %p20 = scmp.eq.s32.totalorder %s19, 0
    %s22 = sadd.s32 %s21, 1
    %s23 = scalar_select %p20, %s21, %s22
    %p26 = pneg %p20
    %p27 = scmp.eq.s32.totalorder %s11, 1
    %p28 = por %p26, %p27
    %p29 = scmp.ne.s32.totalorder %s21, %s24
    %p30 = scmp.eq.s32.totalorder %s11, 0
    %p31 = por %p29, %p30
    %p32 = scmp.ne.s32.totalorder %s21, %s24
    %p33 = scmp.eq.s32.totalorder %s16, 1
    %p34 = por %p32, %p33
    %p35 = scmp.ne.s32.totalorder %s24, %s25
    %p36 = scmp.eq.s32.totalorder %s16, 0
    %p37 = por %p35, %p36
    %p38 = scmp.ne.s32.totalorder %s24, %s25
    %p39 = scmp.eq.s32.totalorder %s17, 1
    %p40 = por %p38, %p39
    %p42 = scmp.ne.s32.totalorder %s25, %s41
    %p43 = scmp.eq.s32.totalorder %s17, 0
    %p44 = por %p42, %p43
    %s46 = sadd.s32 %s45, 1
    %p49 = scmp.eq.s32.totalorder %s11, 1
    %p50 = scmp.ne.s32.totalorder %s45, %s47
    %p51 = scmp.eq.s32.totalorder %s11, 0
    %p52 = por %p50, %p51
    %p53 = scmp.ne.s32.totalorder %s45, %s47
    %p54 = scmp.eq.s32.totalorder %s16, 1
    %p55 = por %p53, %p54
    %p56 = scmp.ne.s32.totalorder %s47, %s48
    %p57 = scmp.eq.s32.totalorder %s16, 0
    %p58 = por %p56, %p57
    %p59 = scmp.ne.s32.totalorder %s47, %s48
    %p60 = scmp.eq.s32.totalorder %s17, 1
    %p61 = por %p59, %p60
    %p63 = scmp.ne.s32.totalorder %s48, %s62
    %p64 = scmp.eq.s32.totalorder %s17, 0
    %p65 = por %p63, %p64
    %s67 = sadd.s32 %s66, 1
    %p70 = scmp.eq.s32.totalorder %s11, 1
    %p71 = scmp.ne.s32.totalorder %s66, %s68
    %p72 = scmp.eq.s32.totalorder %s11, 0
    %p73 = por %p71, %p72
    %p74 = scmp.ne.s32.totalorder %s66, %s68
    %p75 = scmp.eq.s32.totalorder %s16, 1
    %p76 = por %p74, %p75
    %p77 = scmp.ne.s32.totalorder %s68, %s69
    %p78 = scmp.eq.s32.totalorder %s16, 0
    %p79 = por %p77, %p78
    %p80 = scmp.ne.s32.totalorder %s68, %s69
    %p81 = scmp.eq.s32.totalorder %s17, 1
    %p82 = por %p80, %p81
    %p84 = scmp.ne.s32.totalorder %s69, %s83
    %p85 = scmp.eq.s32.totalorder %s17, 0
    %p86 = por %p84, %p85
    %s87 = ssub.s32 %s11, %s18
    %p88 = scmp.eq.s32.totalorder %s87, 0
    %s90 = sadd.s32 %s89, 1
    %s91 = scalar_select %p88, %s89, %s90
    %p94 = pneg %p88
    %p95 = scmp.eq.s32.totalorder %s11, 1
    %p96 = por %p94, %p95
    %p97 = scmp.ne.s32.totalorder %s89, %s92
    %p98 = scmp.eq.s32.totalorder %s11, 0
    %p99 = por %p97, %p98
    %p100 = scmp.ne.s32.totalorder %s89, %s92
    %p101 = scmp.eq.s32.totalorder %s16, 1
    %p102 = por %p100, %p101
    %p103 = scmp.ne.s32.totalorder %s92, %s93
    %p104 = scmp.eq.s32.totalorder %s16, 0
    %p105 = por %p103, %p104
    %p106 = scmp.ne.s32.totalorder %s92, %s93
    %p107 = scmp.eq.s32.totalorder %s17, 1
    %p108 = por %p106, %p107
    %p110 = scmp.ne.s32.totalorder %s93, %s109
    %p111 = scmp.eq.s32.totalorder %s17, 0
    %p112 = por %p110, %p111
    %s113 = ssub.s32 %s11, %s18
    %p114 = scmp.eq.s32.totalorder %s113, 0
    %s116 = sadd.s32 %s115, 1
    %s117 = scalar_select %p114, %s115, %s116
    %p120 = pneg %p114
    %p121 = scmp.eq.s32.totalorder %s11, 1
    %p122 = por %p120, %p121
    %p123 = scmp.ne.s32.totalorder %s115, %s118
    %p124 = scmp.eq.s32.totalorder %s11, 0
    %p125 = por %p123, %p124
    %p126 = scmp.ne.s32.totalorder %s115, %s118
    %p127 = scmp.eq.s32.totalorder %s16, 1
    %p128 = por %p126, %p127
    %p129 = scmp.ne.s32.totalorder %s118, %s119
    %p130 = scmp.eq.s32.totalorder %s16, 0
    %p131 = por %p129, %p130
    %p132 = scmp.ne.s32.totalorder %s118, %s119
    %p133 = scmp.eq.s32.totalorder %s17, 1
    %p134 = por %p132, %p133
    %p136 = scmp.ne.s32.totalorder %s119, %s135
    %p137 = scmp.eq.s32.totalorder %s17, 0
    %p138 = por %p136, %p137
    %p139 = scmp.le.s32.totalorder 1, %s11
    %p140 = scmp.lt.s32.totalorder %s11, 3
    %p141 = pnand %p139, %p140
    %p142 = pneg %p141
    // Predicated region
    $region9: #{tpu_custom_call.1} parent=5 // pred_check
      _
    $region10: #{tpu_custom_call.1} parent=5 // pred_check_branch
      %144 = sbr.rel (%p141) target = $region12
    $region11: #{tpu_custom_call.1} parent=5 // pred_region
      %s145 = ssub.s32 %s11, 1
      // Predicated region
      $region13: #{tpu_custom_call.1} parent=11 // pred_check
        %p146 = pneg %p58
      $region14: #{tpu_custom_call.1} parent=11 // pred_check_branch
        %148 = sbr.rel (%p146) target = $region16
      $region15: #{tpu_custom_call.1} parent=11 // pred_region
        _
      $region16: #{tpu_custom_call.1} parent=11 // pred_fallthru
        _
      // Predicated region
      $region17: #{tpu_custom_call.1} parent=11 // pred_check
        %p149 = pneg %p79
      $region18: #{tpu_custom_call.1} parent=11 // pred_check_branch
        %151 = sbr.rel (%p149) target = $region20
      $region19: #{tpu_custom_call.1} parent=11 // pred_region
        _
      $region20: #{tpu_custom_call.1} parent=11 // pred_fallthru
        _
    $region12: #{tpu_custom_call.1} parent=5 // pred_fallthru
      _
    %p152 = scmp.lt.s32.totalorder %s11, 2
    // Predicated region
    $region21: #{tpu_custom_call.1} parent=5 // pred_check
      %p153 = pneg %p152
    $region22: #{tpu_custom_call.1} parent=5 // pred_check_branch
      %155 = sbr.rel (%p153) target = $region24
    $region23: #{tpu_custom_call.1} parent=5 // pred_region
      // Predicated region
      $region25: #{tpu_custom_call.1} parent=23 // pred_check
        %p156 = pneg %p31
      $region26: #{tpu_custom_call.1} parent=23 // pred_check_branch
        %158 = sbr.rel (%p156) target = $region28
      $region27: #{tpu_custom_call.1} parent=23 // pred_region
        %s159 = smul.u32 32, %s11
        %p160 = scmp.lt.s32.totalorder %s159, 63
        %s161 = scalar_select %p160, %s159, 63
        %s162 = smul.addr %s161, 4
        %s163 = scalar_lea.vmem %s0, %s162
        %s164 = smul.u32 32, %s11
      $region28: #{tpu_custom_call.1} parent=23 // pred_fallthru
        _
    $region24: #{tpu_custom_call.1} parent=5 // pred_fallthru
      _
    %p165 = scmp.le.s32.totalorder 1, %s11
    %p166 = scmp.lt.s32.totalorder %s11, 3
    %p167 = pnand %p165, %p166
    %p168 = pneg %p167
    // Predicated region
    $region29: #{tpu_custom_call.1} parent=5 // pred_check
      _
    $region30: #{tpu_custom_call.1} parent=5 // pred_check_branch
      %170 = sbr.rel (%p167) target = $region32
    $region31: #{tpu_custom_call.1} parent=5 // pred_region
      %s171 = ssub.s32 %s11, 1
      %s172 = smul.u32 32, %s16
      %p173 = scmp.lt.s32.totalorder %s172, 63
      %s174 = scalar_select %p173, %s172, 63
      %s175 = smul.addr %s174, 4
      %s176 = scalar_lea.vmem %s0, %s175
      %p177 = pneg %p37
      %p178 = pneg %p34
      %p179 = pneg %p58
      %p180 = pneg %p55
      %p181 = pneg %p79
      %p182 = pneg %p76
      %p183 = pneg %p105
      %p184 = pneg %p102
      %s185 = smul.u32 32, %s16
      %p186 = scmp.lt.s32.totalorder %s185, 63
      %s187 = scalar_select %p186, %s185, 63
      %s188 = smul.addr %s187, 4
      %s189 = scalar_lea.vmem %s3, %s188
      %p190 = pneg %p131
      %p191 = pneg %p128
      %s192 = smul.u32 32, %s16
      %p193 = scmp.lt.s32.totalorder %s192, 63
      %s194 = scalar_select %p193, %s192, 63
      %s195 = smul.addr %s194, 8
      %s196 = scalar_lea.vmem %s4, %s195
      %s197 = smul.u32 32, %s16
      %p198 = scmp.lt.s32.totalorder %s197, 63
      %s199 = scalar_select %p198, %s197, 63
      %s200 = smul.addr %s199, 4
      %s201 = scalar_lea.vmem %s0, %s200
      %s202 = smul.u32 32, %s16
      %s203 = smul.u32 32, %s16
      %p204 = scmp.lt.s32.totalorder %s203, 63
      %s205 = scalar_select %p204, %s203, 63
      %s206 = smul.addr %s205, 4
      %s207 = scalar_lea.vmem %s3, %s206
      %s208 = smul.u32 32, %s16
      %s209 = smul.u32 32, %s16
      %p210 = scmp.lt.s32.totalorder %s209, 63
      %s211 = scalar_select %p210, %s209, 63
      %s212 = smul.addr %s211, 8
      %s213 = scalar_lea.vmem %s4, %s212
      %s214 = smul.u32 32, %s16
      %v216 = vld [vmem:[%s201] sm:$0xf]
      %v217 = vld [vmem:[%s201 + $0x4] sm:$0xf]
      %v218 = vld [vmem:[%s201 + $0x8] sm:$0xf]
      %v219 = vld [vmem:[%s201 + $0xc] sm:$0xf]
      %v220 = vld [vmem:[%s201 + $0x10] sm:$0xf]
      %v221 = vld [vmem:[%s201 + $0x14] sm:$0xf]
      %v222 = vld [vmem:[%s201 + $0x18] sm:$0xf]
      %v223 = vld [vmem:[%s201 + $0x1c] sm:$0xf]
      %v224 = vld [vmem:[%s201 + $0x20] sm:$0xf]
      %v225 = vld [vmem:[%s201 + $0x24] sm:$0xf]
      %v226 = vld [vmem:[%s201 + $0x28] sm:$0xf]
      %v227 = vld [vmem:[%s201 + $0x2c] sm:$0xf]
      %v228 = vld [vmem:[%s201 + $0x30] sm:$0xf]
      %v229 = vld [vmem:[%s201 + $0x34] sm:$0xf]
      %v230 = vld [vmem:[%s201 + $0x38] sm:$0xf]
      %v231 = vld [vmem:[%s201 + $0x3c] sm:$0xf]
      %v232 = vld [vmem:[%s201 + $0x40] sm:$0xf]
      %v233 = vld [vmem:[%s201 + $0x44] sm:$0xf]
      %v234 = vld [vmem:[%s201 + $0x48] sm:$0xf]
      %v235 = vld [vmem:[%s201 + $0x4c] sm:$0xf]
      %v236 = vld [vmem:[%s201 + $0x50] sm:$0xf]
      %v237 = vld [vmem:[%s201 + $0x54] sm:$0xf]
      %v238 = vld [vmem:[%s201 + $0x58] sm:$0xf]
      %v239 = vld [vmem:[%s201 + $0x5c] sm:$0xf]
      %v240 = vld [vmem:[%s201 + $0x60] sm:$0xf]
      %v241 = vld [vmem:[%s201 + $0x64] sm:$0xf]
      %v242 = vld [vmem:[%s201 + $0x68] sm:$0xf]
      %v243 = vld [vmem:[%s201 + $0x6c] sm:$0xf]
      %v244 = vld [vmem:[%s201 + $0x70] sm:$0xf]
      %v245 = vld [vmem:[%s201 + $0x74] sm:$0xf]
      %v246 = vld [vmem:[%s201 + $0x78] sm:$0xf]
      %v247 = vld [vmem:[%s201 + $0x7c] sm:$0xf]
      %v248 = vld [vmem:[%s1] sm:$0xf]
      %v249 = vld [vmem:[%s1 + $0x4] sm:$0xf]
      %v250 = vld [vmem:[%s1 + $0x8] sm:$0xf]
      %v251 = vld [vmem:[%s1 + $0xc] sm:$0xf]
      %v252 = vld [vmem:[%s1 + $0x10] sm:$0xf]
      %v253 = vld [vmem:[%s1 + $0x14] sm:$0xf]
      %v254 = vld [vmem:[%s1 + $0x18] sm:$0xf]
      %v255 = vld [vmem:[%s1 + $0x1c] sm:$0xf]
      %v288 = vunpack.c.l.b16 %v216
      %v289 = vunpack.c.l.b16 %v217
      %v290 = vunpack.c.l.b16 %v218
      %v291 = vunpack.c.l.b16 %v219
      %v292 = vunpack.c.l.b16 %v220
      %v293 = vunpack.c.l.b16 %v221
      %v294 = vunpack.c.l.b16 %v222
      %v295 = vunpack.c.l.b16 %v223
      %v296 = vunpack.c.l.b16 %v224
      %v297 = vunpack.c.l.b16 %v225
      %v298 = vunpack.c.l.b16 %v226
      %v299 = vunpack.c.l.b16 %v227
      %v300 = vunpack.c.l.b16 %v228
      %v301 = vunpack.c.l.b16 %v229
      %v302 = vunpack.c.l.b16 %v230
      %v303 = vunpack.c.l.b16 %v231
      %v304 = vunpack.c.l.b16 %v232
      %v305 = vunpack.c.l.b16 %v233
      %v306 = vunpack.c.l.b16 %v234
      %v307 = vunpack.c.l.b16 %v235
      %v308 = vunpack.c.l.b16 %v236
      %v309 = vunpack.c.l.b16 %v237
      %v310 = vunpack.c.l.b16 %v238
      %v311 = vunpack.c.l.b16 %v239
      %v312 = vunpack.c.l.b16 %v240
      %v313 = vunpack.c.l.b16 %v241
      %v314 = vunpack.c.l.b16 %v242
      %v315 = vunpack.c.l.b16 %v243
      %v316 = vunpack.c.l.b16 %v244
      %v317 = vunpack.c.l.b16 %v245
      %v318 = vunpack.c.l.b16 %v246
      %v319 = vunpack.c.l.b16 %v247
      %v320 = vpack.c.b16 %v289, %v288
      %v321 = vpack.c.b16 %v291, %v290
      %v322 = vpack.c.b16 %v293, %v292
      %v323 = vpack.c.b16 %v295, %v294
      %v324 = vpack.c.b16 %v297, %v296
      %v325 = vpack.c.b16 %v299, %v298
      %v326 = vpack.c.b16 %v301, %v300
      %v327 = vpack.c.b16 %v303, %v302
      %v328 = vpack.c.b16 %v305, %v304
      %v329 = vpack.c.b16 %v307, %v306
      %v330 = vpack.c.b16 %v309, %v308
      %v331 = vpack.c.b16 %v311, %v310
      %v332 = vpack.c.b16 %v313, %v312
      %v333 = vpack.c.b16 %v315, %v314
      %v334 = vpack.c.b16 %v317, %v316
      %v335 = vpack.c.b16 %v319, %v318
      %v344 = vunpack.c.l.b16 %v248
      %v345 = vunpack.c.l.b16 %v249
      %v346 = vunpack.c.l.b16 %v250
      %v347 = vunpack.c.l.b16 %v251
      %v348 = vunpack.c.l.b16 %v252
      %v349 = vunpack.c.l.b16 %v253
      %v350 = vunpack.c.l.b16 %v254
      %v351 = vunpack.c.l.b16 %v255
      %v352 = vpack.c.b16 %v345, %v344
      %v353 = vpack.c.b16 %v347, %v346
      %v354 = vpack.c.b16 %v349, %v348
      %v355 = vpack.c.b16 %v351, %v350
      %vm360 = vcmask 523264
      %v362 = vsel %vm360, %v320, 0
      %v365 = vsel %vm360, %v321, 0
      %v368 = vsel %vm360, %v322, 0
      %v371 = vsel %vm360, %v323, 0
      %v374 = vsel %vm360, %v324, 0
      %v377 = vsel %vm360, %v325, 0
      %v380 = vsel %vm360, %v326, 0
      %v383 = vsel %vm360, %v327, 0
      %v386 = vsel %vm360, %v328, 0
      %v389 = vsel %vm360, %v329, 0
      %v392 = vsel %vm360, %v330, 0
      %v395 = vsel %vm360, %v331, 0
      %v398 = vsel %vm360, %v332, 0
      %v401 = vsel %vm360, %v333, 0
      %v404 = vsel %vm360, %v334, 0
      %v407 = vsel %vm360, %v335, 0
      %409 = vmatpush.bf16.msra.mxu0 0
      %410 = vmatpush.bf16.msra.mxu0 0
      %411 = vmatpush.bf16.msra.mxu0 0
      %412 = vmatpush.bf16.msra.mxu0 0
      %413 = vmatpush.bf16.msra.mxu0 %v355
      %414 = vmatpush.bf16.msra.mxu0 %v354
      %415 = vmatpush.bf16.msra.mxu0 %v353
      %416 = vmatpush.bf16.msra.mxu0 %v352
      %417 = vmatmul.bf16.gmra.mxu0 %v362
      %v418 = vpop.f32.mrf.mxu0
      %v419 = vadd.f32 0.0, %v418
      %v420 = vpop.f32.mrf.mxu0
      %v421 = vadd.f32 0.0, %v420
      %422 = vmatmul.bf16.gmra.mxu0 %v365
      %v423 = vpop.f32.mrf.mxu0
      %v424 = vadd.f32 0.0, %v423
      %v425 = vpop.f32.mrf.mxu0
      %v426 = vadd.f32 0.0, %v425
      %427 = vmatmul.bf16.gmra.mxu0 %v368
      %v428 = vpop.f32.mrf.mxu0
      %v429 = vadd.f32 0.0, %v428
      %v430 = vpop.f32.mrf.mxu0
      %v431 = vadd.f32 0.0, %v430
      %432 = vmatmul.bf16.gmra.mxu0 %v371
      %v433 = vpop.f32.mrf.mxu0
      %v434 = vadd.f32 0.0, %v433
      %v435 = vpop.f32.mrf.mxu0
      %v436 = vadd.f32 0.0, %v435
      %437 = vmatmul.bf16.gmra.mxu0 %v374
      %v438 = vpop.f32.mrf.mxu0
      %v439 = vadd.f32 0.0, %v438
      %v440 = vpop.f32.mrf.mxu0
      %v441 = vadd.f32 0.0, %v440
      %442 = vmatmul.bf16.gmra.mxu0 %v377
      %v443 = vpop.f32.mrf.mxu0
      %v444 = vadd.f32 0.0, %v443
      %v445 = vpop.f32.mrf.mxu0
      %v446 = vadd.f32 0.0, %v445
      %447 = vmatmul.bf16.gmra.mxu0 %v380
      %v448 = vpop.f32.mrf.mxu0
      %v449 = vadd.f32 0.0, %v448
      %v450 = vpop.f32.mrf.mxu0
      %v451 = vadd.f32 0.0, %v450
      %452 = vmatmul.bf16.gmra.mxu0 %v383
      %v453 = vpop.f32.mrf.mxu0
      %v454 = vadd.f32 0.0, %v453
      %v455 = vpop.f32.mrf.mxu0
      %v456 = vadd.f32 0.0, %v455
      %457 = vmatmul.bf16.gmra.mxu0 %v386
      %v458 = vpop.f32.mrf.mxu0
      %v459 = vadd.f32 0.0, %v458
      %v460 = vpop.f32.mrf.mxu0
      %v461 = vadd.f32 0.0, %v460
      %462 = vmatmul.bf16.gmra.mxu0 %v389
      %v463 = vpop.f32.mrf.mxu0
      %v464 = vadd.f32 0.0, %v463
      %v465 = vpop.f32.mrf.mxu0
      %v466 = vadd.f32 0.0, %v465
      %467 = vmatmul.bf16.gmra.mxu0 %v392
      %v468 = vpop.f32.mrf.mxu0
      %v469 = vadd.f32 0.0, %v468
      %v470 = vpop.f32.mrf.mxu0
      %v471 = vadd.f32 0.0, %v470
      %472 = vmatmul.bf16.gmra.mxu0 %v395
      %v473 = vpop.f32.mrf.mxu0
      %v474 = vadd.f32 0.0, %v473
      %v475 = vpop.f32.mrf.mxu0
      %v476 = vadd.f32 0.0, %v475
      %477 = vmatmul.bf16.gmra.mxu0 %v398
      %v478 = vpop.f32.mrf.mxu0
      %v479 = vadd.f32 0.0, %v478
      %v480 = vpop.f32.mrf.mxu0
      %v481 = vadd.f32 0.0, %v480
      %482 = vmatmul.bf16.gmra.mxu0 %v401
      %v483 = vpop.f32.mrf.mxu0
      %v484 = vadd.f32 0.0, %v483
      %v485 = vpop.f32.mrf.mxu0
      %v486 = vadd.f32 0.0, %v485
      %487 = vmatmul.bf16.gmra.mxu0 %v404
      %v488 = vpop.f32.mrf.mxu0
      %v489 = vadd.f32 0.0, %v488
      %v490 = vpop.f32.mrf.mxu0
      %v491 = vadd.f32 0.0, %v490
      %492 = vmatmul.bf16.gmra.mxu0 %v407
      %v493 = vpop.f32.mrf.mxu0
      %v494 = vadd.f32 0.0, %v493
      %v495 = vpop.f32.mrf.mxu0
      %v496 = vadd.f32 0.0, %v495
      %497 = vdwg.mxu0
      %v498 = vpack.c.bf16 %v419, %v419
      %v499 = vpack.c.bf16 %v421, %v421
      %v500 = vpack.c.bf16 %v424, %v424
      %v501 = vpack.c.bf16 %v426, %v426
      %v502 = vpack.c.bf16 %v429, %v429
      %v503 = vpack.c.bf16 %v431, %v431
      %v504 = vpack.c.bf16 %v434, %v434
      %v505 = vpack.c.bf16 %v436, %v436
      %v506 = vpack.c.bf16 %v439, %v439
      %v507 = vpack.c.bf16 %v441, %v441
      %v508 = vpack.c.bf16 %v444, %v444
      %v509 = vpack.c.bf16 %v446, %v446
      %v510 = vpack.c.bf16 %v449, %v449
      %v511 = vpack.c.bf16 %v451, %v451
      %v512 = vpack.c.bf16 %v454, %v454
      %v513 = vpack.c.bf16 %v456, %v456
      %v514 = vpack.c.bf16 %v459, %v459
      %v515 = vpack.c.bf16 %v461, %v461
      %v516 = vpack.c.bf16 %v464, %v464
      %v517 = vpack.c.bf16 %v466, %v466
      %v518 = vpack.c.bf16 %v469, %v469
      %v519 = vpack.c.bf16 %v471, %v471
      %v520 = vpack.c.bf16 %v474, %v474
      %v521 = vpack.c.bf16 %v476, %v476
      %v522 = vpack.c.bf16 %v479, %v479
      %v523 = vpack.c.bf16 %v481, %v481
      %v524 = vpack.c.bf16 %v484, %v484
      %v525 = vpack.c.bf16 %v486, %v486
      %v526 = vpack.c.bf16 %v489, %v489
      %v527 = vpack.c.bf16 %v491, %v491
      %v528 = vpack.c.bf16 %v494, %v494
      %v529 = vpack.c.bf16 %v496, %v496
      %vm530 = vcmask 519168
      %531 = vst.msk [vmem:[%s207] sm:$0xf] %vm530, %v498
      %532 = vst.msk [vmem:[%s207 + $0x4] sm:$0xf] %vm530, %v499
      %533 = vst.msk [vmem:[%s207 + $0x8] sm:$0xf] %vm530, %v500
      %534 = vst.msk [vmem:[%s207 + $0xc] sm:$0xf] %vm530, %v501
      %535 = vst.msk [vmem:[%s207 + $0x10] sm:$0xf] %vm530, %v502
      %536 = vst.msk [vmem:[%s207 + $0x14] sm:$0xf] %vm530, %v503
      %537 = vst.msk [vmem:[%s207 + $0x18] sm:$0xf] %vm530, %v504
      %538 = vst.msk [vmem:[%s207 + $0x1c] sm:$0xf] %vm530, %v505
      %539 = vst.msk [vmem:[%s207 + $0x20] sm:$0xf] %vm530, %v506
      %540 = vst.msk [vmem:[%s207 + $0x24] sm:$0xf] %vm530, %v507
      %541 = vst.msk [vmem:[%s207 + $0x28] sm:$0xf] %vm530, %v508
      %542 = vst.msk [vmem:[%s207 + $0x2c] sm:$0xf] %vm530, %v509
      %543 = vst.msk [vmem:[%s207 + $0x30] sm:$0xf] %vm530, %v510
      %544 = vst.msk [vmem:[%s207 + $0x34] sm:$0xf] %vm530, %v511
      %545 = vst.msk [vmem:[%s207 + $0x38] sm:$0xf] %vm530, %v512
      %546 = vst.msk [vmem:[%s207 + $0x3c] sm:$0xf] %vm530, %v513
      %547 = vst.msk [vmem:[%s207 + $0x40] sm:$0xf] %vm530, %v514
      %548 = vst.msk [vmem:[%s207 + $0x44] sm:$0xf] %vm530, %v515
      %549 = vst.msk [vmem:[%s207 + $0x48] sm:$0xf] %vm530, %v516
      %550 = vst.msk [vmem:[%s207 + $0x4c] sm:$0xf] %vm530, %v517
      %551 = vst.msk [vmem:[%s207 + $0x50] sm:$0xf] %vm530, %v518
      %552 = vst.msk [vmem:[%s207 + $0x54] sm:$0xf] %vm530, %v519
      %553 = vst.msk [vmem:[%s207 + $0x58] sm:$0xf] %vm530, %v520
      %554 = vst.msk [vmem:[%s207 + $0x5c] sm:$0xf] %vm530, %v521
      %555 = vst.msk [vmem:[%s207 + $0x60] sm:$0xf] %vm530, %v522
      %556 = vst.msk [vmem:[%s207 + $0x64] sm:$0xf] %vm530, %v523
      %557 = vst.msk [vmem:[%s207 + $0x68] sm:$0xf] %vm530, %v524
      %558 = vst.msk [vmem:[%s207 + $0x6c] sm:$0xf] %vm530, %v525
      %559 = vst.msk [vmem:[%s207 + $0x70] sm:$0xf] %vm530, %v526
      %560 = vst.msk [vmem:[%s207 + $0x74] sm:$0xf] %vm530, %v527
      %561 = vst.msk [vmem:[%s207 + $0x78] sm:$0xf] %vm530, %v528
      %562 = vst.msk [vmem:[%s207 + $0x7c] sm:$0xf] %vm530, %v529
      %v563 = vld [vmem:[%s2] sm:$0xf]
      %v564 = vld [vmem:[%s2 + $0x4] sm:$0xf]
      %v565 = vld [vmem:[%s2 + $0x8] sm:$0xf]
      %v566 = vld [vmem:[%s2 + $0xc] sm:$0xf]
      %v567 = vld [vmem:[%s2 + $0x10] sm:$0xf]
      %v568 = vld [vmem:[%s2 + $0x14] sm:$0xf]
      %v569 = vld [vmem:[%s2 + $0x18] sm:$0xf]
      %v570 = vld [vmem:[%s2 + $0x1c] sm:$0xf]
      %v603 = vunpack.c.l.b16 %v498
      %v604 = vunpack.c.l.b16 %v499
      %v605 = vunpack.c.l.b16 %v500
      %v606 = vunpack.c.l.b16 %v501
      %v607 = vunpack.c.l.b16 %v502
      %v608 = vunpack.c.l.b16 %v503
      %v609 = vunpack.c.l.b16 %v504
      %v610 = vunpack.c.l.b16 %v505
      %v611 = vunpack.c.l.b16 %v506
      %v612 = vunpack.c.l.b16 %v507
      %v613 = vunpack.c.l.b16 %v508
      %v614 = vunpack.c.l.b16 %v509
      %v615 = vunpack.c.l.b16 %v510
      %v616 = vunpack.c.l.b16 %v511
      %v617 = vunpack.c.l.b16 %v512
      %v618 = vunpack.c.l.b16 %v513
      %v619 = vunpack.c.l.b16 %v514
      %v620 = vunpack.c.l.b16 %v515
      %v621 = vunpack.c.l.b16 %v516
      %v622 = vunpack.c.l.b16 %v517
      %v623 = vunpack.c.l.b16 %v518
      %v624 = vunpack.c.l.b16 %v519
      %v625 = vunpack.c.l.b16 %v520
      %v626 = vunpack.c.l.b16 %v521
      %v627 = vunpack.c.l.b16 %v522
      %v628 = vunpack.c.l.b16 %v523
      %v629 = vunpack.c.l.b16 %v524
      %v630 = vunpack.c.l.b16 %v525
      %v631 = vunpack.c.l.b16 %v526
      %v632 = vunpack.c.l.b16 %v527
      %v633 = vunpack.c.l.b16 %v528
      %v634 = vunpack.c.l.b16 %v529
      %v635 = vpack.c.b16 %v604, %v603
      %v636 = vpack.c.b16 %v606, %v605
      %v637 = vpack.c.b16 %v608, %v607
      %v638 = vpack.c.b16 %v610, %v609
      %v639 = vpack.c.b16 %v612, %v611
      %v640 = vpack.c.b16 %v614, %v613
      %v641 = vpack.c.b16 %v616, %v615
      %v642 = vpack.c.b16 %v618, %v617
      %v643 = vpack.c.b16 %v620, %v619
      %v644 = vpack.c.b16 %v622, %v621
      %v645 = vpack.c.b16 %v624, %v623
      %v646 = vpack.c.b16 %v626, %v625
      %v647 = vpack.c.b16 %v628, %v627
      %v648 = vpack.c.b16 %v630, %v629
      %v649 = vpack.c.b16 %v632, %v631
      %v650 = vpack.c.b16 %v634, %v633
      %v659 = vunpack.c.l.b16 %v563
      %v660 = vunpack.c.l.b16 %v564
      %v661 = vunpack.c.l.b16 %v565
      %v662 = vunpack.c.l.b16 %v566
      %v663 = vunpack.c.l.b16 %v567
      %v664 = vunpack.c.l.b16 %v568
      %v665 = vunpack.c.l.b16 %v569
      %v666 = vunpack.c.l.b16 %v570
      %v667 = vpack.c.b16 %v660, %v659
      %v668 = vpack.c.b16 %v662, %v661
      %v669 = vpack.c.b16 %v664, %v663
      %v670 = vpack.c.b16 %v666, %v665
      %v676 = vsel %vm360, %v635, 0
      %v679 = vsel %vm360, %v636, 0
      %v682 = vsel %vm360, %v637, 0
      %v685 = vsel %vm360, %v638, 0
      %v688 = vsel %vm360, %v639, 0
      %v691 = vsel %vm360, %v640, 0
      %v694 = vsel %vm360, %v641, 0
      %v697 = vsel %vm360, %v642, 0
      %v700 = vsel %vm360, %v643, 0
      %v703 = vsel %vm360, %v644, 0
      %v706 = vsel %vm360, %v645, 0
      %v709 = vsel %vm360, %v646, 0
      %v712 = vsel %vm360, %v647, 0
      %v715 = vsel %vm360, %v648, 0
      %v718 = vsel %vm360, %v649, 0
      %v721 = vsel %vm360, %v650, 0
      %723 = vmatpush.bf16.msra.mxu0 0
      %724 = vmatpush.bf16.msra.mxu0 0
      %725 = vmatpush.bf16.msra.mxu0 0
      %726 = vmatpush.bf16.msra.mxu0 0
      %727 = vmatpush.bf16.msra.mxu0 %v670
      %728 = vmatpush.bf16.msra.mxu0 %v669
      %729 = vmatpush.bf16.msra.mxu0 %v668
      %730 = vmatpush.bf16.msra.mxu0 %v667
      %731 = vmatmul.bf16.gmra.mxu0 %v676
      %v732 = vpop.f32.mrf.mxu0
      %v733 = vadd.f32 0.0, %v732
      %v734 = vpop.f32.mrf.mxu0
      %v735 = vadd.f32 0.0, %v734
      %736 = vmatmul.bf16.gmra.mxu0 %v679
      %v737 = vpop.f32.mrf.mxu0
      %v738 = vadd.f32 0.0, %v737
      %v739 = vpop.f32.mrf.mxu0
      %v740 = vadd.f32 0.0, %v739
      %741 = vmatmul.bf16.gmra.mxu0 %v682
      %v742 = vpop.f32.mrf.mxu0
      %v743 = vadd.f32 0.0, %v742
      %v744 = vpop.f32.mrf.mxu0
      %v745 = vadd.f32 0.0, %v744
      %746 = vmatmul.bf16.gmra.mxu0 %v685
      %v747 = vpop.f32.mrf.mxu0
      %v748 = vadd.f32 0.0, %v747
      %v749 = vpop.f32.mrf.mxu0
      %v750 = vadd.f32 0.0, %v749
      %751 = vmatmul.bf16.gmra.mxu0 %v688
      %v752 = vpop.f32.mrf.mxu0
      %v753 = vadd.f32 0.0, %v752
      %v754 = vpop.f32.mrf.mxu0
      %v755 = vadd.f32 0.0, %v754
      %756 = vmatmul.bf16.gmra.mxu0 %v691
      %v757 = vpop.f32.mrf.mxu0
      %v758 = vadd.f32 0.0, %v757
      %v759 = vpop.f32.mrf.mxu0
      %v760 = vadd.f32 0.0, %v759
      %761 = vmatmul.bf16.gmra.mxu0 %v694
      %v762 = vpop.f32.mrf.mxu0
      %v763 = vadd.f32 0.0, %v762
      %v764 = vpop.f32.mrf.mxu0
      %v765 = vadd.f32 0.0, %v764
      %766 = vmatmul.bf16.gmra.mxu0 %v697
      %v767 = vpop.f32.mrf.mxu0
      %v768 = vadd.f32 0.0, %v767
      %v769 = vpop.f32.mrf.mxu0
      %v770 = vadd.f32 0.0, %v769
      %771 = vmatmul.bf16.gmra.mxu0 %v700
      %v772 = vpop.f32.mrf.mxu0
      %v773 = vadd.f32 0.0, %v772
      %v774 = vpop.f32.mrf.mxu0
      %v775 = vadd.f32 0.0, %v774
      %776 = vmatmul.bf16.gmra.mxu0 %v703
      %v777 = vpop.f32.mrf.mxu0
      %v778 = vadd.f32 0.0, %v777
      %v779 = vpop.f32.mrf.mxu0
      %v780 = vadd.f32 0.0, %v779
      %781 = vmatmul.bf16.gmra.mxu0 %v706
      %v782 = vpop.f32.mrf.mxu0
      %v783 = vadd.f32 0.0, %v782
      %v784 = vpop.f32.mrf.mxu0
      %v785 = vadd.f32 0.0, %v784
      %786 = vmatmul.bf16.gmra.mxu0 %v709
      %v787 = vpop.f32.mrf.mxu0
      %v788 = vadd.f32 0.0, %v787
      %v789 = vpop.f32.mrf.mxu0
      %v790 = vadd.f32 0.0, %v789
      %791 = vmatmul.bf16.gmra.mxu0 %v712
      %v792 = vpop.f32.mrf.mxu0
      %v793 = vadd.f32 0.0, %v792
      %v794 = vpop.f32.mrf.mxu0
      %v795 = vadd.f32 0.0, %v794
      %796 = vmatmul.bf16.gmra.mxu0 %v715
      %v797 = vpop.f32.mrf.mxu0
      %v798 = vadd.f32 0.0, %v797
      %v799 = vpop.f32.mrf.mxu0
      %v800 = vadd.f32 0.0, %v799
      %801 = vmatmul.bf16.gmra.mxu0 %v718
      %v802 = vpop.f32.mrf.mxu0
      %v803 = vadd.f32 0.0, %v802
      %v804 = vpop.f32.mrf.mxu0
      %v805 = vadd.f32 0.0, %v804
      %806 = vmatmul.bf16.gmra.mxu0 %v721
      %v807 = vpop.f32.mrf.mxu0
      %v808 = vadd.f32 0.0, %v807
      %v809 = vpop.f32.mrf.mxu0
      %v810 = vadd.f32 0.0, %v809
      %811 = vdwg.mxu0
      %vm812 = vcmask 64512
      %813 = vst.msk [vmem:[%s213] sm:$0xff] %vm812, %v733
      %814 = vst.msk [vmem:[%s213 + $0x8] sm:$0xff] %vm812, %v735
      %815 = vst.msk [vmem:[%s213 + $0x10] sm:$0xff] %vm812, %v738
      %816 = vst.msk [vmem:[%s213 + $0x18] sm:$0xff] %vm812, %v740
      %817 = vst.msk [vmem:[%s213 + $0x20] sm:$0xff] %vm812, %v743
      %818 = vst.msk [vmem:[%s213 + $0x28] sm:$0xff] %vm812, %v745
      %819 = vst.msk [vmem:[%s213 + $0x30] sm:$0xff] %vm812, %v748
      %820 = vst.msk [vmem:[%s213 + $0x38] sm:$0xff] %vm812, %v750
      %821 = vst.msk [vmem:[%s213 + $0x40] sm:$0xff] %vm812, %v753
      %822 = vst.msk [vmem:[%s213 + $0x48] sm:$0xff] %vm812, %v755
      %823 = vst.msk [vmem:[%s213 + $0x50] sm:$0xff] %vm812, %v758
      %824 = vst.msk [vmem:[%s213 + $0x58] sm:$0xff] %vm812, %v760
      %825 = vst.msk [vmem:[%s213 + $0x60] sm:$0xff] %vm812, %v763
      %826 = vst.msk [vmem:[%s213 + $0x68] sm:$0xff] %vm812, %v765
      %827 = vst.msk [vmem:[%s213 + $0x70] sm:$0xff] %vm812, %v768
      %828 = vst.msk [vmem:[%s213 + $0x78] sm:$0xff] %vm812, %v770
      %829 = vst.msk [vmem:[%s213 + $0x80] sm:$0xff] %vm812, %v773
      %830 = vst.msk [vmem:[%s213 + $0x88] sm:$0xff] %vm812, %v775
      %831 = vst.msk [vmem:[%s213 + $0x90] sm:$0xff] %vm812, %v778
      %832 = vst.msk [vmem:[%s213 + $0x98] sm:$0xff] %vm812, %v780
      %833 = vst.msk [vmem:[%s213 + $0xa0] sm:$0xff] %vm812, %v783
      %834 = vst.msk [vmem:[%s213 + $0xa8] sm:$0xff] %vm812, %v785
      %835 = vst.msk [vmem:[%s213 + $0xb0] sm:$0xff] %vm812, %v788
      %836 = vst.msk [vmem:[%s213 + $0xb8] sm:$0xff] %vm812, %v790
      %837 = vst.msk [vmem:[%s213 + $0xc0] sm:$0xff] %vm812, %v793
      %838 = vst.msk [vmem:[%s213 + $0xc8] sm:$0xff] %vm812, %v795
      %839 = vst.msk [vmem:[%s213 + $0xd0] sm:$0xff] %vm812, %v798
      %840 = vst.msk [vmem:[%s213 + $0xd8] sm:$0xff] %vm812, %v800
      %841 = vst.msk [vmem:[%s213 + $0xe0] sm:$0xff] %vm812, %v803
      %842 = vst.msk [vmem:[%s213 + $0xe8] sm:$0xff] %vm812, %v805
      %843 = vst.msk [vmem:[%s213 + $0xf0] sm:$0xff] %vm812, %v808
      %844 = vst.msk [vmem:[%s213 + $0xf8] sm:$0xff] %vm812, %v810
      %s845 = smul.u32 32, %s16
      %p846 = scmp.lt.s32.totalorder %s845, 63
      %s847 = scalar_select %p846, %s845, 63
      %s848 = smul.addr %s847, 4
      %s849 = scalar_lea.vmem %s3, %s848
      %s850 = smul.u32 32, %s16
      %p851 = scmp.lt.s32.totalorder %s850, 63
      %s852 = scalar_select %p851, %s850, 63
      %s853 = smul.addr %s852, 8
      %s854 = scalar_lea.vmem %s4, %s853
      // Predicated region
      $region33: #{tpu_custom_call.1} parent=31 // pred_check
        %p855 = pneg %p102
      $region34: #{tpu_custom_call.1} parent=31 // pred_check_branch
        %857 = sbr.rel (%p855) target = $region36
      $region35: #{tpu_custom_call.1} parent=31 // pred_region
        %s858 = smul.u32 32, %s16
      $region36: #{tpu_custom_call.1} parent=31 // pred_fallthru
        _
      // Predicated region
      $region37: #{tpu_custom_call.1} parent=31 // pred_check
        %p859 = pneg %p128
      $region38: #{tpu_custom_call.1} parent=31 // pred_check_branch
        %861 = sbr.rel (%p859) target = $region40
      $region39: #{tpu_custom_call.1} parent=31 // pred_region
        %s862 = smul.u32 32, %s16
      $region40: #{tpu_custom_call.1} parent=31 // pred_fallthru
        _
    $region32: #{tpu_custom_call.1} parent=5 // pred_fallthru
      _
    %p863 = scmp.le.s32.totalorder 2, %s11
    // Predicated region
    $region41: #{tpu_custom_call.1} parent=5 // pred_check
      %p864 = pneg %p863
    $region42: #{tpu_custom_call.1} parent=5 // pred_check_branch
      %866 = sbr.rel (%p864) target = $region44
    $region43: #{tpu_custom_call.1} parent=5 // pred_region
      %s867 = ssub.s32 %s11, 2
      // Predicated region
      $region45: #{tpu_custom_call.1} parent=43 // pred_check
        %p868 = pneg %p108
      $region46: #{tpu_custom_call.1} parent=43 // pred_check_branch
        %870 = sbr.rel (%p868) target = $region48
      $region47: #{tpu_custom_call.1} parent=43 // pred_region
        %s871 = smul.u32 32, %s17
        %p872 = scmp.lt.s32.totalorder %s871, 63
        %s873 = scalar_select %p872, %s871, 63
        %s874 = smul.addr %s873, 4
        %s875 = scalar_lea.vmem %s3, %s874
      $region48: #{tpu_custom_call.1} parent=43 // pred_fallthru
        _
      // Predicated region
      $region49: #{tpu_custom_call.1} parent=43 // pred_check
        %p876 = pneg %p134
      $region50: #{tpu_custom_call.1} parent=43 // pred_check_branch
        %878 = sbr.rel (%p876) target = $region52
      $region51: #{tpu_custom_call.1} parent=43 // pred_region
        %s879 = smul.u32 32, %s17
        %p880 = scmp.lt.s32.totalorder %s879, 63
        %s881 = scalar_select %p880, %s879, 63
        %s882 = smul.addr %s881, 8
        %s883 = scalar_lea.vmem %s4, %s882
      $region52: #{tpu_custom_call.1} parent=43 // pred_fallthru
        _
    $region44: #{tpu_custom_call.1} parent=5 // pred_fallthru
      _
  $region6: #{tpu_custom_call.1} parent=0 // loop_footer
    %s15 = sadd.s32 1, %s11
  $region7: #{tpu_custom_call.1} parent=0 // loop_footer_branch
    %10 = sbr.rel target = $region3
  $region8: #{tpu_custom_call.1} parent=0 // loop_exit
    _

</llo_original>
